<compile_context>
chip_gen: v7x
topology: tpu7x:2x2x1
jax: 0.10.0
libtpu: 0.0.40
codegen_flags: <defaults>
</compile_context>

<pallas_src>
import functools

import jax
import jax.numpy as jnp
from jax.experimental import pallas as pl
from jax.experimental.pallas import tpu as pltpu


_LANE = 512           # lane-dense last dim, large multiple of 128
_MAX_TILE_ROWS = 512  # 512 x 512 x 4B = 1 MiB per f32 tile


def _bits_to_uniform(bits_u32):
    """Uniform float32 in [0, 1) from the top 24 bits of raw uint32 bits.

    VPU-only math (shift + int->float convert + mul); no bitcast needed.
    """
    top = (bits_u32 >> 8).astype(jnp.int32)           # values in [0, 2^24)
    return top.astype(jnp.float32) * jnp.float32(1.0 / (1 << 24))


def _noise_kernel(x_ref, bits_ref, o_ref, *, std):
    half = x_ref.shape[-1] // 2

    # One uint32 word of entropy per output element; split the tile's bits into
    # two uniform streams and use BOTH Box-Muller outputs (2 normals per pair),
    # halving the log/sqrt work per element.
    u0 = _bits_to_uniform(bits_ref[:, :half]) + jnp.float32(1.0 / (1 << 24))  # (0, 1]
    u1 = _bits_to_uniform(bits_ref[:, half:])                                  # [0, 1)

    two_pi = jnp.float32(2.0 * 3.14159265358979323846)
    r = jnp.sqrt(jnp.float32(-2.0) * jnp.log(u0))
    theta = two_pi * u1
    z0 = r * jnp.cos(theta)
    z1 = r * jnp.sin(theta)

    s = jnp.float32(std)
    o_ref[:, :half] = (x_ref[:, :half].astype(jnp.float32) + s * z0).astype(o_ref.dtype)
    o_ref[:, half:] = (x_ref[:, half:].astype(jnp.float32) + s * z1).astype(o_ref.dtype)


def noise_pass_backward(x, std, seed=0):
    """Forward pass of NoisePassBackward: x + N(0, std).

    x: NCHW (or any-shaped) float array. Returns an array of the same
    shape/dtype. Backward of the original module is identity, so no custom VJP
    is needed for the forward-only kernel.
    """
    if std <= 1e-6:
        # Matches the Noise module's no-op threshold (returns the input itself).
        return x

    orig_shape = x.shape
    orig_dtype = x.dtype
    total = int(x.size)

    # Lane-dense 2-D slab (rows, _LANE); rows padded to a multiple of the tile.
    rows_needed = -(-total // _LANE)
    tile_r = min(_MAX_TILE_ROWS, rows_needed)
    rows = -(-rows_needed // tile_r) * tile_r
    padded = rows * _LANE

    xf = x.reshape(-1)
    if padded != total:
        xf = jnp.pad(xf, (0, padded - total))
    x2d = xf.reshape(rows, _LANE)

    # One uint32 of entropy per output element, generated outside the kernel so
    # the kernel also runs under interpret mode (no TPU-only PRNG primitives).
    # TODO(synk): switch to in-kernel pltpu.prng_seed/prng_random_bits (seed
    # mixed with pl.program_id) when the runtime supports it, to drop one HBM
    # read stream.
    bits = jax.random.bits(jax.random.PRNGKey(seed), (rows, _LANE), dtype=jnp.uint32)

    kernel = functools.partial(_noise_kernel, std=float(std))

    out2d = pl.pallas_call(
        kernel,
        out_shape=jax.ShapeDtypeStruct((rows, _LANE), orig_dtype),
        grid=(rows // tile_r,),
        in_specs=[
            pl.BlockSpec((tile_r, _LANE), lambda i: (i, 0)),  # x tile
            pl.BlockSpec((tile_r, _LANE), lambda i: (i, 0)),  # random bits tile
        ],
        out_specs=pl.BlockSpec((tile_r, _LANE), lambda i: (i, 0)),
        compiler_params=pltpu.CompilerParams(
            dimension_semantics=("parallel",),
        ),
    )(x2d, bits)

    return out2d.reshape(-1)[:total].reshape(orig_shape)


if __name__ == "__main__":
    key = jax.random.PRNGKey(0)
    # Small NCHW input consistent with an image-like tensor.
    x = jax.random.normal(key, (2, 4, 16, 16), dtype=jnp.float32)

    std = 0.1
    out = noise_pass_backward(x, std, seed=1234)
    out = jax.block_until_ready(out)

    assert out.shape == x.shape and out.dtype == x.dtype

    # Sanity check: the added noise should be ~N(0, std).
    noise = out - x
    emp_std = float(jnp.std(noise))
    emp_mean = float(jnp.mean(noise))
    assert 0.03 < emp_std < 0.3, f"unexpected noise std {emp_std}"
    assert abs(emp_mean) < 0.05, f"unexpected noise mean {emp_mean}"

    print("KERNEL_OK")
</pallas_src>

<mosaic_0001>
module attributes {stable_mosaic.version = 11 : i64} {
  func.func @_noise_kernel(%arg0: i32, %arg1: memref<4x512xf32, #tpu.memory_space<vmem>>, %arg2: memref<4x512xi32, #tpu.memory_space<vmem>>, %arg3: memref<4x512xf32, #tpu.memory_space<vmem>>) attributes {dimension_semantics = [#tpu.dimension_semantics<parallel>], iteration_bounds = array<i64: 1>, scalar_prefetch = 0 : i64, scratch_operands = 0 : i64, tpu.core_type = #tpu.core_type<tc>, window_params = [{transform_indices = @transform_0, window_bounds = array<i64: 4, 512>}, {transform_indices = @transform_1, window_bounds = array<i64: 4, 512>}, {transform_indices = @transform_2, window_bounds = array<i64: 4, 512>}]} {
    %c0 = arith.constant 0 : index
    %c0_0 = arith.constant 0 : index
    %0 = vector.load %arg2[%c0, %c0_0] : memref<4x512xi32, #tpu.memory_space<vmem>>, vector<4x256xi32>
    %c8_i32 = arith.constant 8 : i32
    %1 = vector.broadcast %c8_i32 : i32 to vector<4x256xi32>
    %2 = arith.shrui %0, %1 : vector<4x256xi32>
    %3 = arith.sitofp %2 : vector<4x256xi32> to vector<4x256xf32>
    %cst = arith.constant 5.96046448E-8 : f32
    %4 = vector.broadcast %cst : f32 to vector<4x256xf32>
    %5 = arith.mulf %3, %4 : vector<4x256xf32>
    %cst_1 = arith.constant 5.96046448E-8 : f32
    %6 = vector.broadcast %cst_1 : f32 to vector<4x256xf32>
    %7 = arith.addf %5, %6 : vector<4x256xf32>
    %c0_2 = arith.constant 0 : index
    %c256 = arith.constant 256 : index
    %8 = vector.load %arg2[%c0_2, %c256] : memref<4x512xi32, #tpu.memory_space<vmem>>, vector<4x256xi32>
    %c8_i32_3 = arith.constant 8 : i32
    %9 = vector.broadcast %c8_i32_3 : i32 to vector<4x256xi32>
    %10 = arith.shrui %8, %9 : vector<4x256xi32>
    %11 = arith.sitofp %10 : vector<4x256xi32> to vector<4x256xf32>
    %cst_4 = arith.constant 5.96046448E-8 : f32
    %12 = vector.broadcast %cst_4 : f32 to vector<4x256xf32>
    %13 = arith.mulf %11, %12 : vector<4x256xf32>
    %14 = math.log %7 : vector<4x256xf32>
    %cst_5 = arith.constant -2.000000e+00 : f32
    %15 = vector.broadcast %cst_5 : f32 to vector<4x256xf32>
    %16 = arith.mulf %15, %14 : vector<4x256xf32>
    %17 = math.sqrt %16 : vector<4x256xf32>
    %cst_6 = arith.constant 6.28318548 : f32
    %18 = vector.broadcast %cst_6 : f32 to vector<4x256xf32>
    %19 = arith.mulf %18, %13 : vector<4x256xf32>
    %20 = math.cos %19 : vector<4x256xf32>
    %21 = arith.mulf %17, %20 : vector<4x256xf32>
    %22 = math.sin %19 : vector<4x256xf32>
    %23 = arith.mulf %17, %22 : vector<4x256xf32>
    %c0_7 = arith.constant 0 : index
    %c0_8 = arith.constant 0 : index
    %24 = vector.load %arg1[%c0_7, %c0_8] : memref<4x512xf32, #tpu.memory_space<vmem>>, vector<4x256xf32>
    %cst_9 = arith.constant 1.000000e-01 : f32
    %25 = vector.broadcast %cst_9 : f32 to vector<4x256xf32>
    %26 = arith.mulf %25, %21 : vector<4x256xf32>
    %27 = arith.addf %24, %26 : vector<4x256xf32>
    %c0_10 = arith.constant 0 : index
    %c0_11 = arith.constant 0 : index
    %28 = vector.load %arg3[%c0_10, %c0_11] : memref<4x512xf32, #tpu.memory_space<vmem>>, vector<4x256xf32>
    tpu.vector_store %arg3[%c0_10, %c0_11], %27 {strides = array<i32>} : memref<4x512xf32, #tpu.memory_space<vmem>>, vector<4x256xf32>,
    %c0_12 = arith.constant 0 : index
    %c256_13 = arith.constant 256 : index
    %29 = vector.load %arg1[%c0_12, %c256_13] : memref<4x512xf32, #tpu.memory_space<vmem>>, vector<4x256xf32>
    %cst_14 = arith.constant 1.000000e-01 : f32
    %30 = vector.broadcast %cst_14 : f32 to vector<4x256xf32>
    %31 = arith.mulf %30, %23 : vector<4x256xf32>
    %32 = arith.addf %29, %31 : vector<4x256xf32>
    %c0_15 = arith.constant 0 : index
    %c256_16 = arith.constant 256 : index
    %33 = vector.load %arg3[%c0_15, %c256_16] : memref<4x512xf32, #tpu.memory_space<vmem>>, vector<4x256xf32>
    tpu.vector_store %arg3[%c0_15, %c256_16], %32 {strides = array<i32>} : memref<4x512xf32, #tpu.memory_space<vmem>>, vector<4x256xf32>,
    return
  }
  func.func @transform_0(%arg0: i32) -> (i32, i32) {
    %c0_i32 = arith.constant 0 : i32
    %c0_i32_0 = arith.constant 0 : i32
    return %arg0, %c0_i32 : i32, i32
  }
  func.func @transform_1(%arg0: i32) -> (i32, i32) {
    %c0_i32 = arith.constant 0 : i32
    %c0_i32_0 = arith.constant 0 : i32
    return %arg0, %c0_i32 : i32, i32
  }
  func.func @transform_2(%arg0: i32) -> (i32, i32) {
    %c0_i32 = arith.constant 0 : i32
    %c0_i32_0 = arith.constant 0 : i32
    return %arg0, %c0_i32 : i32, i32
  }
}

</mosaic_0001>

<llo_original>
// kernel: tpu_custom_call.1
$region0: #{tpu_custom_call.1}
  #allocation0 [shape = 'u32[]', space=smem, size = 0x4, offset = 0x4, fixed_abs, tag = 'smem constant byte address 0x4 - core index']
  #allocation1 [shape = 'u32[144,128]{1,0:T(1,128)}', space=vmem, size = 0x12000, scoped, tag = 'internal scratch']
  %s0 = inlined_call_operand.hbm [shape: f32[4,512], index: 0, kind: input, shape index: {}]
  %s1 = inlined_call_operand.hbm [shape: u32[4,512], index: 1, kind: input, shape index: {}]
  %s2 = inlined_call_operand.hbm [shape: f32[4,512], index: 2, kind: output, shape index: {}]
  %s3 = sld [smem:[#allocation0]]
  $region26: #{tpu_custom_call.1} parent=0
    _
  %s5 = ssub.s32 1, %s3
  %s6 = scalar_select 0, %s5, %s3
  $region1: #{tpu_custom_call.1} parent=0
    #allocation2 [shape = 'u8[8192]{0}', space=vmem, size = 0x2000, scoped, tag = 'input window, operand 0, single buffered']
    #allocation3 [shape = 's32[1]{0}', space=sflag, size = 0x4, scoped, tag = 'scoped memory for tpu_custom_call.1']
    #allocation4 [shape = 's32[1]{0}', space=sflag, size = 0x4, scoped, tag = 'scoped memory for tpu_custom_call.1']
    #allocation5 [shape = 'u8[8192]{0}', space=vmem, size = 0x2000, scoped, tag = 'input window, operand 1, single buffered']
    #allocation6 [shape = 's32[1]{0}', space=sflag, size = 0x4, scoped, tag = 'scoped memory for tpu_custom_call.1']
    #allocation7 [shape = 'u8[8192]{0}', space=vmem, size = 0x2000, scoped, tag = 'output window, operand 0, single buffered']
    %7 = vsyncpa [#allocation3], 0
    %8 = vsyncpa [#allocation6], 0
    %9 = vsyncpa [#allocation4], 0
    // Predicated region
    $region2: #{tpu_custom_call.1} parent=1 // pred_check
      _
    $region3: #{tpu_custom_call.1} parent=1 // pred_check_branch
      %11 = sbr.rel (0) target = $region5
    $region4: #{tpu_custom_call.1} parent=1 // pred_region
      %s13 = ssub.s32 256, 256
      %14 = vsyncadd [#allocation3], %s13
      %s16 = sshll.u32 [#allocation2], 4
      %s17 = int_to_ptr.vmem [resolvable:$true] %s16
      %19 = dma.hbm_to_vmem [thread:$0]  %s0, 256, %s17, [#allocation3]
    $region5: #{tpu_custom_call.1} parent=1 // pred_fallthru
      _
    // Predicated region
    $region6: #{tpu_custom_call.1} parent=1 // pred_check
      _
    $region7: #{tpu_custom_call.1} parent=1 // pred_check_branch
      %21 = sbr.rel (0) target = $region9
    $region8: #{tpu_custom_call.1} parent=1 // pred_region
      %s23 = ssub.s32 256, 256
      %24 = vsyncadd [#allocation6], %s23
      %s26 = sshll.u32 [#allocation5], 4
      %s27 = int_to_ptr.vmem [resolvable:$true] %s26
      %29 = dma.hbm_to_vmem [thread:$0]  %s1, 256, %s27, [#allocation6]
    $region9: #{tpu_custom_call.1} parent=1 // pred_fallthru
      _
    // Predicated region
    $region10: #{tpu_custom_call.1} parent=1 // pred_check
      _
    $region11: #{tpu_custom_call.1} parent=1 // pred_check_branch
      %31 = sbr.rel (0) target = $region13
    $region12: #{tpu_custom_call.1} parent=1 // pred_region
      %32 = dma.done [#allocation3], 256
    $region13: #{tpu_custom_call.1} parent=1 // pred_fallthru
      _
    // Predicated region
    $region14: #{tpu_custom_call.1} parent=1 // pred_check
      _
    $region15: #{tpu_custom_call.1} parent=1 // pred_check_branch
      %34 = sbr.rel (0) target = $region17
    $region16: #{tpu_custom_call.1} parent=1 // pred_region
      %35 = dma.done [#allocation6], 256
    $region17: #{tpu_custom_call.1} parent=1 // pred_fallthru
      _
    %v36 = vld [vmem:[#allocation5] sm:$0xff]
    %v37 = vshrl.u32 %v36, 8
    %v38 = vcvt.s32.f32 %v37
    %v39 = vmul.f32 %v38, 5.9604645e-08
    %v40 = vadd.f32 %v39, 5.9604645e-08
    %v41 = vld [vmem:[#allocation5 + $0x8] sm:$0xff]
    %v42 = vshrl.u32 %v41, 8
    %v43 = vcvt.s32.f32 %v42
    %v44 = vmul.f32 %v43, 5.9604645e-08
    %v45 = vlog2.pop %v40
    %v46 = vmul.f32 %v45, 0.6931472
    %v47 = vmul.f32 %v46, -2.0
    %v48 = vrsqrt.pop %v47
    %v49 = vmul.f32 %v47, %v48
    %vm50 = vcmp.eq.f32.partialorder %v47, inf
    %v51 = vsel %vm50, %v47, %v49
    %vm52 = vcmp.eq.f32.partialorder %v47, 0.0
    %v53 = vand.u32 %v47, 2147483648
    %v54 = vsel %vm52, %v53, %v51
    %v55 = vmul.f32 %v44, 6.2831855
    %v56 = vand.u32 2147483647, %v55
    %vm57 = vcmp.le.f32.partialorder %v56, 0.7853982
    %vm58 = vcmp.lt.s32.totalorder %v55, 0
    %v59 = vand.u32 %v55, 2139095040
    %v60 = vshrl.u32 %v59, 23
    %v61 = vsub.s32 %v60, 127
    %v62 = vand.u32 2147483647, %v55
    %v63 = vand.u32 %v62, 8388607
    %v64 = vor.u32 %v63, 8388608
    %v65 = vsub.s32 0, %v64
    %v66 = vadd.s32 %v61, 1
    %vm67 = vcmp.gt.s32.totalorder %v66, 0
    %v68 = vsel %vm67, %v66, 0
    %v69 = vshrl.u32 %v68, 5
    %v70 = vand.u32 %v68, 31
    %v71 = vsub.s32 32, %v70
    %v72 = vshrl.u32 683565275, %v71
    %v73 = vshll.u32 683565275, %v70
    %v74 = vshrl.u32 2475754826, %v71
    %v75 = vor.u32 %v73, %v74
    %v76 = vshll.u32 2475754826, %v70
    %v77 = vshrl.u32 2131351028, %v71
    %v78 = vor.u32 %v76, %v77
    %v79 = vshll.u32 2131351028, %v70
    %v80 = vshrl.u32 2102212464, %v71
    %v81 = vor.u32 %v79, %v80
    %v82 = vshll.u32 2102212464, %v70
    %v83 = vshrl.u32 920167782, %v71
    %v84 = vor.u32 %v82, %v83
    %v85 = vshll.u32 920167782, %v70
    %v86 = vshrl.u32 1326507024, %v71
    %v87 = vor.u32 %v85, %v86
    %vm88 = vcmp.lt.s32.totalorder %v69, 1
    %vm89 = vcmp.lt.s32.totalorder %v69, 2
    %vm90 = vcmp.lt.s32.totalorder %v69, 3
    %vm91 = vcmp.lt.s32.totalorder %v69, 4
    %v92 = vsel %vm88, %v72, %v75
    %v93 = vsel %vm91, %v81, 2102212464
    %v94 = vsel %vm90, %v78, %v93
    %v95 = vsel %vm89, %v92, %v94
    %v96 = vsel %vm88, %v75, %v78
    %v97 = vsel %vm91, %v84, 920167782
    %v98 = vsel %vm90, %v81, %v97
    %v99 = vsel %vm89, %v96, %v98
    %v100 = vsel %vm88, %v78, %v81
    %v101 = vsel %vm91, %v87, 1326507024
    %v102 = vsel %vm90, %v84, %v101
    %v103 = vsel %vm89, %v100, %v102
    %v104 = vshll.u32 %v64, 8
    %v105 = vmul.u32.u64.compose %v104, %v103
    %v106 = vextract.low.u32 %v105
    %v107 = vextract.high.u32 %v105
    %v108 = vmul.u32.u64.compose %v104, %v99
    %v109 = vextract.low.u32 %v108
    %v110 = vextract.high.u32 %v108
    %v111 = vmul.u32 %v104, %v95
    %v112 = vadd.s32 %v107, %v109
    %vm113 = vc.u32 %v107, %v109
    %v114 = vadd.s32 %v110, 1
    %v115 = vsel %vm113, %v114, %v110
    %v116 = vadd.s32 %v111, %v115
    %v117 = vadd.s32 %v116, 536870912
    %v118 = vshrl.u32 %v117, 30
    %v119 = vshll.u32 %v118, 30
    %v120 = vsub.s32 %v116, %v119
    %vm121 = vcmp.lt.s32.totalorder %v120, 0
    %v122 = vsub.s32 0, %v120
    %v123 = vsel %vm121, %v122, %v120
    %v124 = vclz %v123
    %v125 = vsub.s32 %v124, 2
    %vm126 = vcmp.gt.s32.totalorder 0, %v125
    %v127 = vsel %vm126, 0, %v125
    %v128 = vsub.s32 32, %v127
    %v129 = vshll.u32 %v120, %v127
    %v130 = vshrl.u32 %v112, %v128
    %v131 = vor.u32 %v129, %v130
    %v132 = vsub.s32 4294967266, %v127
    %v133 = vadd.s32 %v132, 127
    %v134 = vshll.u32 %v133, 23
    %v135 = vor.u32 4788187, %v134
    %v136 = vand.u32 2147483647, %v135
    %v138 = vcvt.s32.f32 %v131
    %v139 = vmul.f32 %v138, %v136
    %v140 = vxor.u32 %v139, 2147483648
    %v141 = vsel %vm58, %v140, %v139
    %v142 = vsub.s32 4, %v118
    %v143 = vsel %vm58, %v142, %v118
    %v144 = vsel %vm57, %v55, %v141
    %v145 = vsel %vm57, 0, %v143
    %v146 = vcosq.f32.pop %v144
    %v147 = vsinq.f32.pop %v144
    %vm148 = vweird.f32 %v55
    %v149 = vand.u32 %v145, 3
    %vm150 = vcmp.lt.s32.totalorder %v149, 2
    %vm151 = vcmp.eq.s32.totalorder %v149, 0
    %v152 = vxor.u32 %v147, 2147483648
    %v153 = vsel %vm151, %v146, %v152
    %vm154 = vcmp.eq.s32.totalorder %v149, 2
    %v155 = vxor.u32 %v146, 2147483648
    %v156 = vsel %vm154, %v155, %v147
    %v157 = vsel %vm150, %v153, %v156
    %v158 = vsel %vm148, nan, %v157
    %v159 = vmul.f32 %v54, %v158
    %v160 = vand.u32 2147483647, %v55
    %vm161 = vcmp.le.f32.partialorder %v160, 0.7853982
    %vm162 = vcmp.lt.s32.totalorder %v55, 0
    %v163 = vand.u32 %v55, 2139095040
    %v164 = vshrl.u32 %v163, 23
    %v165 = vsub.s32 %v164, 127
    %v166 = vand.u32 2147483647, %v55
    %v167 = vand.u32 %v166, 8388607
    %v168 = vor.u32 %v167, 8388608
    %v169 = vsub.s32 0, %v168
    %v170 = vadd.s32 %v165, 1
    %vm171 = vcmp.gt.s32.totalorder %v170, 0
    %v172 = vsel %vm171, %v170, 0
    %v173 = vshrl.u32 %v172, 5
    %v174 = vand.u32 %v172, 31
    %v175 = vsub.s32 32, %v174
    %v176 = vshrl.u32 683565275, %v175
    %v177 = vshll.u32 683565275, %v174
    %v178 = vshrl.u32 2475754826, %v175
    %v179 = vor.u32 %v177, %v178
    %v180 = vshll.u32 2475754826, %v174
    %v181 = vshrl.u32 2131351028, %v175
    %v182 = vor.u32 %v180, %v181
    %v183 = vshll.u32 2131351028, %v174
    %v184 = vshrl.u32 2102212464, %v175
    %v185 = vor.u32 %v183, %v184
    %v186 = vshll.u32 2102212464, %v174
    %v187 = vshrl.u32 920167782, %v175
    %v188 = vor.u32 %v186, %v187
    %v189 = vshll.u32 920167782, %v174
    %v190 = vshrl.u32 1326507024, %v175
    %v191 = vor.u32 %v189, %v190
    %vm192 = vcmp.lt.s32.totalorder %v173, 1
    %vm193 = vcmp.lt.s32.totalorder %v173, 2
    %vm194 = vcmp.lt.s32.totalorder %v173, 3
    %vm195 = vcmp.lt.s32.totalorder %v173, 4
    %v196 = vsel %vm192, %v176, %v179
    %v197 = vsel %vm195, %v185, 2102212464
    %v198 = vsel %vm194, %v182, %v197
    %v199 = vsel %vm193, %v196, %v198
    %v200 = vsel %vm192, %v179, %v182
    %v201 = vsel %vm195, %v188, 920167782
    %v202 = vsel %vm194, %v185, %v201
    %v203 = vsel %vm193, %v200, %v202
    %v204 = vsel %vm192, %v182, %v185
    %v205 = vsel %vm195, %v191, 1326507024
    %v206 = vsel %vm194, %v188, %v205
    %v207 = vsel %vm193, %v204, %v206
    %v208 = vshll.u32 %v168, 8
    %v209 = vmul.u32.u64.compose %v208, %v207
    %v210 = vextract.low.u32 %v209
    %v211 = vextract.high.u32 %v209
    %v212 = vmul.u32.u64.compose %v208, %v203
    %v213 = vextract.low.u32 %v212
    %v214 = vextract.high.u32 %v212
    %v215 = vmul.u32 %v208, %v199
    %v216 = vadd.s32 %v211, %v213
    %vm217 = vc.u32 %v211, %v213
    %v218 = vadd.s32 %v214, 1
    %v219 = vsel %vm217, %v218, %v214
    %v220 = vadd.s32 %v215, %v219
    %v221 = vadd.s32 %v220, 536870912
    %v222 = vshrl.u32 %v221, 30
    %v223 = vshll.u32 %v222, 30
    %v224 = vsub.s32 %v220, %v223
    %vm225 = vcmp.lt.s32.totalorder %v224, 0
    %v226 = vsub.s32 0, %v224
    %v227 = vsel %vm225, %v226, %v224
    %v228 = vclz %v227
    %v229 = vsub.s32 %v228, 2
    %vm230 = vcmp.gt.s32.totalorder 0, %v229
    %v231 = vsel %vm230, 0, %v229
    %v232 = vsub.s32 32, %v231
    %v233 = vshll.u32 %v224, %v231
    %v234 = vshrl.u32 %v216, %v232
    %v235 = vor.u32 %v233, %v234
    %v236 = vsub.s32 4294967266, %v231
    %v237 = vadd.s32 %v236, 127
    %v238 = vshll.u32 %v237, 23
    %v239 = vor.u32 4788187, %v238
    %v240 = vand.u32 2147483647, %v239
    %v242 = vcvt.s32.f32 %v235
    %v243 = vmul.f32 %v242, %v240
    %v244 = vxor.u32 %v243, 2147483648
    %v245 = vsel %vm162, %v244, %v243
    %v246 = vsub.s32 4, %v222
    %v247 = vsel %vm162, %v246, %v222
    %v248 = vsel %vm161, %v55, %v245
    %v249 = vsel %vm161, 0, %v247
    %v250 = vcosq.f32.pop %v248
    %v251 = vsinq.f32.pop %v248
    %vm252 = vweird.f32 %v55
    %v253 = vadd.s32 %v249, 3
    %v254 = vand.u32 %v253, 3
    %vm255 = vcmp.lt.s32.totalorder %v254, 2
    %vm256 = vcmp.eq.s32.totalorder %v254, 0
    %v257 = vxor.u32 %v251, 2147483648
    %v258 = vsel %vm256, %v250, %v257
    %vm259 = vcmp.eq.s32.totalorder %v254, 2
    %v260 = vxor.u32 %v250, 2147483648
    %v261 = vsel %vm259, %v260, %v251
    %v262 = vsel %vm255, %v258, %v261
    %v263 = vsel %vm252, nan, %v262
    %v264 = vmul.f32 %v54, %v263
    %v265 = vld [vmem:[#allocation2] sm:$0xff]
    %v266 = vmul.f32 %v159, 0.1
    %v267 = vadd.f32 %v265, %v266
    %268 = vst [vmem:[#allocation7] sm:$0xff] %v267
    %v269 = vld [vmem:[#allocation2 + $0x8] sm:$0xff]
    %v270 = vmul.f32 %v264, 0.1
    %v271 = vadd.f32 %v269, %v270
    %272 = vst [vmem:[#allocation7 + $0x8] sm:$0xff] %v271
    // Predicated region
    $region18: #{tpu_custom_call.1} parent=1 // pred_check
      _
    $region19: #{tpu_custom_call.1} parent=1 // pred_check_branch
      %274 = sbr.rel (0) target = $region21
    $region20: #{tpu_custom_call.1} parent=1 // pred_region
      %s276 = ssub.s32 256, 256
      %277 = vsyncadd [#allocation4], %s276
      %s279 = sshll.u32 [#allocation7], 4
      %s280 = int_to_ptr.vmem [resolvable:$true] %s279
      %282 = dma.vmem_to_hbm [thread:$0]  %s280, 256, %s2, [#allocation4]
    $region21: #{tpu_custom_call.1} parent=1 // pred_fallthru
      _
    // Predicated region
    $region22: #{tpu_custom_call.1} parent=1 // pred_check
      _
    $region23: #{tpu_custom_call.1} parent=1 // pred_check_branch
      %284 = sbr.rel (0) target = $region25
    $region24: #{tpu_custom_call.1} parent=1 // pred_region
      %285 = dma.done [#allocation4], 256
    $region25: #{tpu_custom_call.1} parent=1 // pred_fallthru
      _
    %286 = vsyncpa [#allocation3], 1
    %287 = vsyncpa [#allocation6], 1
    %288 = vsyncpa [#allocation4], 1

</llo_original>
